<compile_context>
chip_gen: v6e
topology: v6e:2x2x1
jax: 0.10.0
libtpu: 0.0.40
codegen_flags: <defaults>
</compile_context>

<pallas_src>
import functools

import jax
import jax.numpy as jnp
from jax.experimental import pallas as pl
from jax.experimental.pallas import tpu as pltpu


def _lens_kernel(u_idx_ref, table_ref, w_ref, b_ref, topic_ref, diff_ref,
                 out_ref, uf_ref, copy_sems, *, batch, tile_b):
    """One grid step over tile_b batch rows: DMA-gather the needed user-factor
    rows, then fused matmul + bias + topic gating + row-sum + difficulty scale
    + sigmoid."""
    i = pl.program_id(0)
    base = i * tile_b
    full_tiles = (batch % tile_b) == 0          # static at trace time

    # ---- Fused embedding gather: copy only the rows this tile needs. --------
    # All starts are issued before any wait so the row DMAs fly concurrently.
    # TODO(synk): for tile_b >> 128, replace the unrolled per-row DMAs with a
    # pl.loop over a small semaphore ring instead of one semaphore per row.
    # TODO(synk): for user tables that comfortably fit VMEM, a one-hot MXU
    # gather (onehot(u_idx) @ table) avoids the per-row DMAs entirely.
    copies = []
    for b in range(tile_b):
        if full_tiles:
            row = base + b
        else:
            # Clamp so padded rows of a partial last tile never read OOB.
            row = jnp.minimum(base + b, batch - 1)
        src = table_ref.at[pl.ds(u_idx_ref[row], 1)]      # (1, F) row in HBM
        dst = uf_ref.at[pl.ds(b, 1)]                      # (1, F) row in VMEM
        cp = pltpu.make_async_copy(src, dst, copy_sems.at[b])
        cp.start()
        copies.append(cp)
    for cp in copies:
        cp.wait()

    uf = uf_ref[...]                                      # (tile_b, F)

    # (tile_b, F) x (T, F) contracting F -> (tile_b, T): no host-side transpose.
    logits = jax.lax.dot_general(
        uf, w_ref[...],
        dimension_numbers=(((1,), (1,)), ((), ())),
        preferred_element_type=jnp.float32)
    logits = logits + b_ref[...]                          # (1, T) bias broadcast

    # Row-reduce the topic-gated logits; apply difficulty AFTER the reduction
    # ((tile_b, 1) VPU multiply instead of (tile_b, T)).
    r = jnp.sum(logits * topic_ref[...], axis=1, keepdims=True)   # (tile_b, 1)
    r = r * diff_ref[...]

    out_ref[...] = jax.nn.sigmoid(r)


def _pick_tile_b(batch):
    # Single block for small batches (full-dim exception to the (8,128) rule);
    # otherwise a 128-row tile: multiple of 8 (sublane aligned), bounded
    # unrolled-DMA / semaphore count, and trivially within VMEM on every gen.
    return batch if batch <= 128 else 128


def interpretable_lens_pallas(u_idx, user_factor_table, g_weight, g_bias,
                              topic, difficulty, *, tile_b=None):
    """u_idx (B,) int32, user_factor_table (U, F) f32, g_weight (T, F) f32,
    g_bias (T,) f32, topic (B, T) f32, difficulty (B,) f32  ->  (B, 1) f32."""
    B, T = topic.shape
    _, F = user_factor_table.shape
    if tile_b is None:
        tile_b = _pick_tile_b(B)

    bias2d = g_bias.reshape(1, T)                         # (1, T)
    diff2d = difficulty.reshape(B, 1)                     # (B, 1)

    kernel = functools.partial(_lens_kernel, batch=B, tile_b=tile_b)

    grid_spec = pltpu.PrefetchScalarGridSpec(
        num_scalar_prefetch=1,                            # u_idx -> SMEM
        grid=(pl.cdiv(B, tile_b),),
        in_specs=[
            pl.BlockSpec(memory_space=pl.ANY),            # factor table stays in HBM
            pl.BlockSpec((T, F), lambda i, u: (0, 0)),    # g_weight resident, no .T
            pl.BlockSpec((1, T), lambda i, u: (0, 0)),    # bias resident
            pl.BlockSpec((tile_b, T), lambda i, u: (i, 0)),   # topic tile
            pl.BlockSpec((tile_b, 1), lambda i, u: (i, 0)),   # difficulty tile
        ],
        out_specs=pl.BlockSpec((tile_b, 1), lambda i, u: (i, 0)),
        scratch_shapes=[
            pltpu.VMEM((tile_b, F), user_factor_table.dtype),  # gathered user factors
            pltpu.SemaphoreType.DMA((tile_b,)),                # one DMA sem per row
        ],
    )

    return pl.pallas_call(
        kernel,
        out_shape=jax.ShapeDtypeStruct((B, 1), jnp.float32),
        grid_spec=grid_spec,
        compiler_params=pltpu.CompilerParams(
            # Batch tiles are fully independent (no carried state), so the grid
            # axis may shard across both TensorCores on v7x.
            dimension_semantics=("parallel",)),
    )(u_idx, user_factor_table, g_weight, bias2d, topic, diff2d)


def encode_user_ids(user_ids, user_to_ix):
    """Host glue (matches the numpy loop in the PyTorch module). Run once per
    batch OUTSIDE the jitted hot path."""
    return jnp.asarray([int(user_to_ix[int(u)]) for u in user_ids],
                       dtype=jnp.int32)


if __name__ == "__main__":
    # Small, deterministic setup.
    batch = 8
    nfactors = 32
    ntopics = 16
    num_users = 12

    key = jax.random.PRNGKey(0)
    k_emb, k_w, k_b, k_topic, k_diff, k_uid = jax.random.split(key, 6)

    # Deterministic "checkpoint": MF user-factor embedding + Linear(nfactors, ntopics).
    user_factor_table = jax.random.normal(k_emb, (num_users, nfactors), jnp.float32)
    g_weight = jax.random.normal(k_w, (ntopics, nfactors), jnp.float32) * 0.1
    g_bias = jax.random.normal(k_b, (ntopics,), jnp.float32) * 0.1

    # Inputs.
    raw_user_ids = [100 + 7 * i for i in range(num_users)]          # arbitrary user id space
    user_to_ix = {uid: ix for ix, uid in enumerate(raw_user_ids)}
    user_batch = [raw_user_ids[int(j)] for j in
                  jax.random.randint(k_uid, (batch,), 0, num_users)]
    topic = jax.random.uniform(k_topic, (batch, ntopics), jnp.float32)
    difficulty = jax.random.uniform(k_diff, (batch,), jnp.float32)

    # Host glue: id -> row index, done once per batch outside the jitted call.
    u_idx = encode_user_ids(user_batch, user_to_ix)

    # Whole forward (gather + matmul + gating + reduce + sigmoid) = one dispatch.
    fwd = jax.jit(lambda *args: interpretable_lens_pallas(*args))
    out = fwd(u_idx, user_factor_table, g_weight, g_bias, topic, difficulty)
    out = jax.block_until_ready(out)

    # Pure-JAX reference check of the same math.
    uf = user_factor_table[u_idx]
    ref = jax.nn.sigmoid(
        ((uf @ g_weight.T + g_bias) * (topic * difficulty[:, None]))
        .sum(axis=1, keepdims=True))
    assert out.shape == (batch, 1)
    assert jnp.allclose(out, ref, atol=1e-5, rtol=1e-5)

    print("KERNEL_OK")
</pallas_src>

<mosaic_0001>
module attributes {stable_mosaic.version = 11 : i64} {
  func.func @_lens_kernel(%arg0: i32, %arg1: memref<8xi32, #tpu.memory_space<smem>>, %arg2: memref<12x32xf32, #tpu.memory_space<any>>, %arg3: memref<16x32xf32, #tpu.memory_space<vmem>>, %arg4: memref<1x16xf32, #tpu.memory_space<vmem>>, %arg5: memref<8x16xf32, #tpu.memory_space<vmem>>, %arg6: memref<8x1xf32, #tpu.memory_space<vmem>>, %arg7: memref<8x1xf32, #tpu.memory_space<vmem>>, %arg8: memref<8x32xf32, #tpu.memory_space<vmem>>, %arg9: memref<8x!tpu.dma_semaphore, #tpu.memory_space<semaphore_mem>>) attributes {dimension_semantics = [#tpu.dimension_semantics<parallel>], iteration_bounds = array<i64: 1>, scalar_prefetch = 1 : i64, scratch_operands = 2 : i64, tpu.core_type = #tpu.core_type<tc>, window_params = [{}, {pipeline_mode = #tpu.pipeline_mode<synchronous>, transform_indices = @transform_1, window_bounds = array<i64: 16, 32>}, {pipeline_mode = #tpu.pipeline_mode<synchronous>, transform_indices = @transform_2, window_bounds = array<i64: 1, 16>}, {transform_indices = @transform_3, window_bounds = array<i64: 8, 16>}, {transform_indices = @transform_4, window_bounds = array<i64: 8, 1>}, {transform_indices = @transform_5, window_bounds = array<i64: 8, 1>}]} {
    %c8_i32 = arith.constant 8 : i32
    %0 = arith.muli %arg0, %c8_i32 : i32
    %c0_i32 = arith.constant 0 : i32
    %1 = arith.addi %0, %c0_i32 : i32
    %2 = arith.index_cast %1 : i32 to index
    %3 = memref.load %arg1[%2] : memref<8xi32, #tpu.memory_space<smem>>
    %c0_i32_0 = arith.constant 0 : i32
    %c0_i32_1 = arith.constant 0 : i32
    %4 = tpu.memref_slice %arg2[%3, %c0_i32_1] : memref<12x32xf32, #tpu.memory_space<any>> -> memref<1x32xf32, #tpu.memory_space<any>>
    %c0_i32_2 = arith.constant 0 : i32
    %c0_i32_3 = arith.constant 0 : i32
    %5 = tpu.memref_slice %arg8[%c0_i32_2, %c0_i32_3] : memref<8x32xf32, #tpu.memory_space<vmem>> -> memref<1x32xf32, #tpu.memory_space<vmem>>
    %6 = tpu.memref_slice %arg9[%c0_i32_0] : memref<8x!tpu.dma_semaphore, #tpu.memory_space<semaphore_mem>> -> memref<1x!tpu.dma_semaphore, #tpu.memory_space<semaphore_mem>>
    %7 = tpu.memref_squeeze %6 : memref<1x!tpu.dma_semaphore, #tpu.memory_space<semaphore_mem>> -> memref<!tpu.dma_semaphore, #tpu.memory_space<semaphore_mem>>
    tpu.enqueue_dma source(%4 : memref<1x32xf32, #tpu.memory_space<any>>) target(%5 : memref<1x32xf32, #tpu.memory_space<vmem>>) target_semaphore(%7 : memref<!tpu.dma_semaphore, #tpu.memory_space<semaphore_mem>>)
    %c1_i32 = arith.constant 1 : i32
    %8 = arith.addi %0, %c1_i32 : i32
    %9 = arith.index_cast %8 : i32 to index
    %10 = memref.load %arg1[%9] : memref<8xi32, #tpu.memory_space<smem>>
    %c1_i32_4 = arith.constant 1 : i32
    %c0_i32_5 = arith.constant 0 : i32
    %11 = tpu.memref_slice %arg2[%10, %c0_i32_5] : memref<12x32xf32, #tpu.memory_space<any>> -> memref<1x32xf32, #tpu.memory_space<any>>
    %c1_i32_6 = arith.constant 1 : i32
    %c0_i32_7 = arith.constant 0 : i32
    %12 = tpu.memref_slice %arg8[%c1_i32_6, %c0_i32_7] : memref<8x32xf32, #tpu.memory_space<vmem>> -> memref<1x32xf32, #tpu.memory_space<vmem>>
    %13 = tpu.memref_slice %arg9[%c1_i32_4] : memref<8x!tpu.dma_semaphore, #tpu.memory_space<semaphore_mem>> -> memref<1x!tpu.dma_semaphore, #tpu.memory_space<semaphore_mem>>
    %14 = tpu.memref_squeeze %13 : memref<1x!tpu.dma_semaphore, #tpu.memory_space<semaphore_mem>> -> memref<!tpu.dma_semaphore, #tpu.memory_space<semaphore_mem>>
    tpu.enqueue_dma source(%11 : memref<1x32xf32, #tpu.memory_space<any>>) target(%12 : memref<1x32xf32, #tpu.memory_space<vmem>>) target_semaphore(%14 : memref<!tpu.dma_semaphore, #tpu.memory_space<semaphore_mem>>)
    %c2_i32 = arith.constant 2 : i32
    %15 = arith.addi %0, %c2_i32 : i32
    %16 = arith.index_cast %15 : i32 to index
    %17 = memref.load %arg1[%16] : memref<8xi32, #tpu.memory_space<smem>>
    %c2_i32_8 = arith.constant 2 : i32
    %c0_i32_9 = arith.constant 0 : i32
    %18 = tpu.memref_slice %arg2[%17, %c0_i32_9] : memref<12x32xf32, #tpu.memory_space<any>> -> memref<1x32xf32, #tpu.memory_space<any>>
    %c2_i32_10 = arith.constant 2 : i32
    %c0_i32_11 = arith.constant 0 : i32
    %19 = tpu.memref_slice %arg8[%c2_i32_10, %c0_i32_11] : memref<8x32xf32, #tpu.memory_space<vmem>> -> memref<1x32xf32, #tpu.memory_space<vmem>>
    %20 = tpu.memref_slice %arg9[%c2_i32_8] : memref<8x!tpu.dma_semaphore, #tpu.memory_space<semaphore_mem>> -> memref<1x!tpu.dma_semaphore, #tpu.memory_space<semaphore_mem>>
    %21 = tpu.memref_squeeze %20 : memref<1x!tpu.dma_semaphore, #tpu.memory_space<semaphore_mem>> -> memref<!tpu.dma_semaphore, #tpu.memory_space<semaphore_mem>>
    tpu.enqueue_dma source(%18 : memref<1x32xf32, #tpu.memory_space<any>>) target(%19 : memref<1x32xf32, #tpu.memory_space<vmem>>) target_semaphore(%21 : memref<!tpu.dma_semaphore, #tpu.memory_space<semaphore_mem>>)
    %c3_i32 = arith.constant 3 : i32
    %22 = arith.addi %0, %c3_i32 : i32
    %23 = arith.index_cast %22 : i32 to index
    %24 = memref.load %arg1[%23] : memref<8xi32, #tpu.memory_space<smem>>
    %c3_i32_12 = arith.constant 3 : i32
    %c0_i32_13 = arith.constant 0 : i32
    %25 = tpu.memref_slice %arg2[%24, %c0_i32_13] : memref<12x32xf32, #tpu.memory_space<any>> -> memref<1x32xf32, #tpu.memory_space<any>>
    %c3_i32_14 = arith.constant 3 : i32
    %c0_i32_15 = arith.constant 0 : i32
    %26 = tpu.memref_slice %arg8[%c3_i32_14, %c0_i32_15] : memref<8x32xf32, #tpu.memory_space<vmem>> -> memref<1x32xf32, #tpu.memory_space<vmem>>
    %27 = tpu.memref_slice %arg9[%c3_i32_12] : memref<8x!tpu.dma_semaphore, #tpu.memory_space<semaphore_mem>> -> memref<1x!tpu.dma_semaphore, #tpu.memory_space<semaphore_mem>>
    %28 = tpu.memref_squeeze %27 : memref<1x!tpu.dma_semaphore, #tpu.memory_space<semaphore_mem>> -> memref<!tpu.dma_semaphore, #tpu.memory_space<semaphore_mem>>
    tpu.enqueue_dma source(%25 : memref<1x32xf32, #tpu.memory_space<any>>) target(%26 : memref<1x32xf32, #tpu.memory_space<vmem>>) target_semaphore(%28 : memref<!tpu.dma_semaphore, #tpu.memory_space<semaphore_mem>>)
    %c4_i32 = arith.constant 4 : i32
    %29 = arith.addi %0, %c4_i32 : i32
    %30 = arith.index_cast %29 : i32 to index
    %31 = memref.load %arg1[%30] : memref<8xi32, #tpu.memory_space<smem>>
    %c4_i32_16 = arith.constant 4 : i32
    %c0_i32_17 = arith.constant 0 : i32
    %32 = tpu.memref_slice %arg2[%31, %c0_i32_17] : memref<12x32xf32, #tpu.memory_space<any>> -> memref<1x32xf32, #tpu.memory_space<any>>
    %c4_i32_18 = arith.constant 4 : i32
    %c0_i32_19 = arith.constant 0 : i32
    %33 = tpu.memref_slice %arg8[%c4_i32_18, %c0_i32_19] : memref<8x32xf32, #tpu.memory_space<vmem>> -> memref<1x32xf32, #tpu.memory_space<vmem>>
    %34 = tpu.memref_slice %arg9[%c4_i32_16] : memref<8x!tpu.dma_semaphore, #tpu.memory_space<semaphore_mem>> -> memref<1x!tpu.dma_semaphore, #tpu.memory_space<semaphore_mem>>
    %35 = tpu.memref_squeeze %34 : memref<1x!tpu.dma_semaphore, #tpu.memory_space<semaphore_mem>> -> memref<!tpu.dma_semaphore, #tpu.memory_space<semaphore_mem>>
    tpu.enqueue_dma source(%32 : memref<1x32xf32, #tpu.memory_space<any>>) target(%33 : memref<1x32xf32, #tpu.memory_space<vmem>>) target_semaphore(%35 : memref<!tpu.dma_semaphore, #tpu.memory_space<semaphore_mem>>)
    %c5_i32 = arith.constant 5 : i32
    %36 = arith.addi %0, %c5_i32 : i32
    %37 = arith.index_cast %36 : i32 to index
    %38 = memref.load %arg1[%37] : memref<8xi32, #tpu.memory_space<smem>>
    %c5_i32_20 = arith.constant 5 : i32
    %c0_i32_21 = arith.constant 0 : i32
    %39 = tpu.memref_slice %arg2[%38, %c0_i32_21] : memref<12x32xf32, #tpu.memory_space<any>> -> memref<1x32xf32, #tpu.memory_space<any>>
    %c5_i32_22 = arith.constant 5 : i32
    %c0_i32_23 = arith.constant 0 : i32
    %40 = tpu.memref_slice %arg8[%c5_i32_22, %c0_i32_23] : memref<8x32xf32, #tpu.memory_space<vmem>> -> memref<1x32xf32, #tpu.memory_space<vmem>>
    %41 = tpu.memref_slice %arg9[%c5_i32_20] : memref<8x!tpu.dma_semaphore, #tpu.memory_space<semaphore_mem>> -> memref<1x!tpu.dma_semaphore, #tpu.memory_space<semaphore_mem>>
    %42 = tpu.memref_squeeze %41 : memref<1x!tpu.dma_semaphore, #tpu.memory_space<semaphore_mem>> -> memref<!tpu.dma_semaphore, #tpu.memory_space<semaphore_mem>>
    tpu.enqueue_dma source(%39 : memref<1x32xf32, #tpu.memory_space<any>>) target(%40 : memref<1x32xf32, #tpu.memory_space<vmem>>) target_semaphore(%42 : memref<!tpu.dma_semaphore, #tpu.memory_space<semaphore_mem>>)
    %c6_i32 = arith.constant 6 : i32
    %43 = arith.addi %0, %c6_i32 : i32
    %44 = arith.index_cast %43 : i32 to index
    %45 = memref.load %arg1[%44] : memref<8xi32, #tpu.memory_space<smem>>
    %c6_i32_24 = arith.constant 6 : i32
    %c0_i32_25 = arith.constant 0 : i32
    %46 = tpu.memref_slice %arg2[%45, %c0_i32_25] : memref<12x32xf32, #tpu.memory_space<any>> -> memref<1x32xf32, #tpu.memory_space<any>>
    %c6_i32_26 = arith.constant 6 : i32
    %c0_i32_27 = arith.constant 0 : i32
    %47 = tpu.memref_slice %arg8[%c6_i32_26, %c0_i32_27] : memref<8x32xf32, #tpu.memory_space<vmem>> -> memref<1x32xf32, #tpu.memory_space<vmem>>
    %48 = tpu.memref_slice %arg9[%c6_i32_24] : memref<8x!tpu.dma_semaphore, #tpu.memory_space<semaphore_mem>> -> memref<1x!tpu.dma_semaphore, #tpu.memory_space<semaphore_mem>>
    %49 = tpu.memref_squeeze %48 : memref<1x!tpu.dma_semaphore, #tpu.memory_space<semaphore_mem>> -> memref<!tpu.dma_semaphore, #tpu.memory_space<semaphore_mem>>
    tpu.enqueue_dma source(%46 : memref<1x32xf32, #tpu.memory_space<any>>) target(%47 : memref<1x32xf32, #tpu.memory_space<vmem>>) target_semaphore(%49 : memref<!tpu.dma_semaphore, #tpu.memory_space<semaphore_mem>>)
    %c7_i32 = arith.constant 7 : i32
    %50 = arith.addi %0, %c7_i32 : i32
    %51 = arith.index_cast %50 : i32 to index
    %52 = memref.load %arg1[%51] : memref<8xi32, #tpu.memory_space<smem>>
    %c7_i32_28 = arith.constant 7 : i32
    %c0_i32_29 = arith.constant 0 : i32
    %53 = tpu.memref_slice %arg2[%52, %c0_i32_29] : memref<12x32xf32, #tpu.memory_space<any>> -> memref<1x32xf32, #tpu.memory_space<any>>
    %c7_i32_30 = arith.constant 7 : i32
    %c0_i32_31 = arith.constant 0 : i32
    %54 = tpu.memref_slice %arg8[%c7_i32_30, %c0_i32_31] : memref<8x32xf32, #tpu.memory_space<vmem>> -> memref<1x32xf32, #tpu.memory_space<vmem>>
    %55 = tpu.memref_slice %arg9[%c7_i32_28] : memref<8x!tpu.dma_semaphore, #tpu.memory_space<semaphore_mem>> -> memref<1x!tpu.dma_semaphore, #tpu.memory_space<semaphore_mem>>
    %56 = tpu.memref_squeeze %55 : memref<1x!tpu.dma_semaphore, #tpu.memory_space<semaphore_mem>> -> memref<!tpu.dma_semaphore, #tpu.memory_space<semaphore_mem>>
    tpu.enqueue_dma source(%53 : memref<1x32xf32, #tpu.memory_space<any>>) target(%54 : memref<1x32xf32, #tpu.memory_space<vmem>>) target_semaphore(%56 : memref<!tpu.dma_semaphore, #tpu.memory_space<semaphore_mem>>)
    %c0_i32_32 = arith.constant 0 : i32
    %c0_i32_33 = arith.constant 0 : i32
    %57 = tpu.memref_slice %arg2[%3, %c0_i32_33] : memref<12x32xf32, #tpu.memory_space<any>> -> memref<1x32xf32, #tpu.memory_space<any>>
    %c0_i32_34 = arith.constant 0 : i32
    %c0_i32_35 = arith.constant 0 : i32
    %58 = tpu.memref_slice %arg8[%c0_i32_34, %c0_i32_35] : memref<8x32xf32, #tpu.memory_space<vmem>> -> memref<1x32xf32, #tpu.memory_space<vmem>>
    %59 = tpu.memref_slice %arg9[%c0_i32_32] : memref<8x!tpu.dma_semaphore, #tpu.memory_space<semaphore_mem>> -> memref<1x!tpu.dma_semaphore, #tpu.memory_space<semaphore_mem>>
    %60 = tpu.memref_squeeze %59 : memref<1x!tpu.dma_semaphore, #tpu.memory_space<semaphore_mem>> -> memref<!tpu.dma_semaphore, #tpu.memory_space<semaphore_mem>>
    tpu.wait_dma2 semaphore(%60 : memref<!tpu.dma_semaphore, #tpu.memory_space<semaphore_mem>>) src(%57 : memref<1x32xf32, #tpu.memory_space<any>>) dst(%58 : memref<1x32xf32, #tpu.memory_space<vmem>>)
    %c1_i32_36 = arith.constant 1 : i32
    %c0_i32_37 = arith.constant 0 : i32
    %61 = tpu.memref_slice %arg2[%10, %c0_i32_37] : memref<12x32xf32, #tpu.memory_space<any>> -> memref<1x32xf32, #tpu.memory_space<any>>
    %c1_i32_38 = arith.constant 1 : i32
    %c0_i32_39 = arith.constant 0 : i32
    %62 = tpu.memref_slice %arg8[%c1_i32_38, %c0_i32_39] : memref<8x32xf32, #tpu.memory_space<vmem>> -> memref<1x32xf32, #tpu.memory_space<vmem>>
    %63 = tpu.memref_slice %arg9[%c1_i32_36] : memref<8x!tpu.dma_semaphore, #tpu.memory_space<semaphore_mem>> -> memref<1x!tpu.dma_semaphore, #tpu.memory_space<semaphore_mem>>
    %64 = tpu.memref_squeeze %63 : memref<1x!tpu.dma_semaphore, #tpu.memory_space<semaphore_mem>> -> memref<!tpu.dma_semaphore, #tpu.memory_space<semaphore_mem>>
    tpu.wait_dma2 semaphore(%64 : memref<!tpu.dma_semaphore, #tpu.memory_space<semaphore_mem>>) src(%61 : memref<1x32xf32, #tpu.memory_space<any>>) dst(%62 : memref<1x32xf32, #tpu.memory_space<vmem>>)
    %c2_i32_40 = arith.constant 2 : i32
    %c0_i32_41 = arith.constant 0 : i32
    %65 = tpu.memref_slice %arg2[%17, %c0_i32_41] : memref<12x32xf32, #tpu.memory_space<any>> -> memref<1x32xf32, #tpu.memory_space<any>>
    %c2_i32_42 = arith.constant 2 : i32
    %c0_i32_43 = arith.constant 0 : i32
    %66 = tpu.memref_slice %arg8[%c2_i32_42, %c0_i32_43] : memref<8x32xf32, #tpu.memory_space<vmem>> -> memref<1x32xf32, #tpu.memory_space<vmem>>
    %67 = tpu.memref_slice %arg9[%c2_i32_40] : memref<8x!tpu.dma_semaphore, #tpu.memory_space<semaphore_mem>> -> memref<1x!tpu.dma_semaphore, #tpu.memory_space<semaphore_mem>>
    %68 = tpu.memref_squeeze %67 : memref<1x!tpu.dma_semaphore, #tpu.memory_space<semaphore_mem>> -> memref<!tpu.dma_semaphore, #tpu.memory_space<semaphore_mem>>
    tpu.wait_dma2 semaphore(%68 : memref<!tpu.dma_semaphore, #tpu.memory_space<semaphore_mem>>) src(%65 : memref<1x32xf32, #tpu.memory_space<any>>) dst(%66 : memref<1x32xf32, #tpu.memory_space<vmem>>)
    %c3_i32_44 = arith.constant 3 : i32
    %c0_i32_45 = arith.constant 0 : i32
    %69 = tpu.memref_slice %arg2[%24, %c0_i32_45] : memref<12x32xf32, #tpu.memory_space<any>> -> memref<1x32xf32, #tpu.memory_space<any>>
    %c3_i32_46 = arith.constant 3 : i32
    %c0_i32_47 = arith.constant 0 : i32
    %70 = tpu.memref_slice %arg8[%c3_i32_46, %c0_i32_47] : memref<8x32xf32, #tpu.memory_space<vmem>> -> memref<1x32xf32, #tpu.memory_space<vmem>>
    %71 = tpu.memref_slice %arg9[%c3_i32_44] : memref<8x!tpu.dma_semaphore, #tpu.memory_space<semaphore_mem>> -> memref<1x!tpu.dma_semaphore, #tpu.memory_space<semaphore_mem>>
    %72 = tpu.memref_squeeze %71 : memref<1x!tpu.dma_semaphore, #tpu.memory_space<semaphore_mem>> -> memref<!tpu.dma_semaphore, #tpu.memory_space<semaphore_mem>>
    tpu.wait_dma2 semaphore(%72 : memref<!tpu.dma_semaphore, #tpu.memory_space<semaphore_mem>>) src(%69 : memref<1x32xf32, #tpu.memory_space<any>>) dst(%70 : memref<1x32xf32, #tpu.memory_space<vmem>>)
    %c4_i32_48 = arith.constant 4 : i32
    %c0_i32_49 = arith.constant 0 : i32
    %73 = tpu.memref_slice %arg2[%31, %c0_i32_49] : memref<12x32xf32, #tpu.memory_space<any>> -> memref<1x32xf32, #tpu.memory_space<any>>
    %c4_i32_50 = arith.constant 4 : i32
    %c0_i32_51 = arith.constant 0 : i32
    %74 = tpu.memref_slice %arg8[%c4_i32_50, %c0_i32_51] : memref<8x32xf32, #tpu.memory_space<vmem>> -> memref<1x32xf32, #tpu.memory_space<vmem>>
    %75 = tpu.memref_slice %arg9[%c4_i32_48] : memref<8x!tpu.dma_semaphore, #tpu.memory_space<semaphore_mem>> -> memref<1x!tpu.dma_semaphore, #tpu.memory_space<semaphore_mem>>
    %76 = tpu.memref_squeeze %75 : memref<1x!tpu.dma_semaphore, #tpu.memory_space<semaphore_mem>> -> memref<!tpu.dma_semaphore, #tpu.memory_space<semaphore_mem>>
    tpu.wait_dma2 semaphore(%76 : memref<!tpu.dma_semaphore, #tpu.memory_space<semaphore_mem>>) src(%73 : memref<1x32xf32, #tpu.memory_space<any>>) dst(%74 : memref<1x32xf32, #tpu.memory_space<vmem>>)
    %c5_i32_52 = arith.constant 5 : i32
    %c0_i32_53 = arith.constant 0 : i32
    %77 = tpu.memref_slice %arg2[%38, %c0_i32_53] : memref<12x32xf32, #tpu.memory_space<any>> -> memref<1x32xf32, #tpu.memory_space<any>>
    %c5_i32_54 = arith.constant 5 : i32
    %c0_i32_55 = arith.constant 0 : i32
    %78 = tpu.memref_slice %arg8[%c5_i32_54, %c0_i32_55] : memref<8x32xf32, #tpu.memory_space<vmem>> -> memref<1x32xf32, #tpu.memory_space<vmem>>
    %79 = tpu.memref_slice %arg9[%c5_i32_52] : memref<8x!tpu.dma_semaphore, #tpu.memory_space<semaphore_mem>> -> memref<1x!tpu.dma_semaphore, #tpu.memory_space<semaphore_mem>>
    %80 = tpu.memref_squeeze %79 : memref<1x!tpu.dma_semaphore, #tpu.memory_space<semaphore_mem>> -> memref<!tpu.dma_semaphore, #tpu.memory_space<semaphore_mem>>
    tpu.wait_dma2 semaphore(%80 : memref<!tpu.dma_semaphore, #tpu.memory_space<semaphore_mem>>) src(%77 : memref<1x32xf32, #tpu.memory_space<any>>) dst(%78 : memref<1x32xf32, #tpu.memory_space<vmem>>)
    %c6_i32_56 = arith.constant 6 : i32
    %c0_i32_57 = arith.constant 0 : i32
    %81 = tpu.memref_slice %arg2[%45, %c0_i32_57] : memref<12x32xf32, #tpu.memory_space<any>> -> memref<1x32xf32, #tpu.memory_space<any>>
    %c6_i32_58 = arith.constant 6 : i32
    %c0_i32_59 = arith.constant 0 : i32
    %82 = tpu.memref_slice %arg8[%c6_i32_58, %c0_i32_59] : memref<8x32xf32, #tpu.memory_space<vmem>> -> memref<1x32xf32, #tpu.memory_space<vmem>>
    %83 = tpu.memref_slice %arg9[%c6_i32_56] : memref<8x!tpu.dma_semaphore, #tpu.memory_space<semaphore_mem>> -> memref<1x!tpu.dma_semaphore, #tpu.memory_space<semaphore_mem>>
    %84 = tpu.memref_squeeze %83 : memref<1x!tpu.dma_semaphore, #tpu.memory_space<semaphore_mem>> -> memref<!tpu.dma_semaphore, #tpu.memory_space<semaphore_mem>>
    tpu.wait_dma2 semaphore(%84 : memref<!tpu.dma_semaphore, #tpu.memory_space<semaphore_mem>>) src(%81 : memref<1x32xf32, #tpu.memory_space<any>>) dst(%82 : memref<1x32xf32, #tpu.memory_space<vmem>>)
    %c7_i32_60 = arith.constant 7 : i32
    %c0_i32_61 = arith.constant 0 : i32
    %85 = tpu.memref_slice %arg2[%52, %c0_i32_61] : memref<12x32xf32, #tpu.memory_space<any>> -> memref<1x32xf32, #tpu.memory_space<any>>
    %c7_i32_62 = arith.constant 7 : i32
    %c0_i32_63 = arith.constant 0 : i32
    %86 = tpu.memref_slice %arg8[%c7_i32_62, %c0_i32_63] : memref<8x32xf32, #tpu.memory_space<vmem>> -> memref<1x32xf32, #tpu.memory_space<vmem>>
    %87 = tpu.memref_slice %arg9[%c7_i32_60] : memref<8x!tpu.dma_semaphore, #tpu.memory_space<semaphore_mem>> -> memref<1x!tpu.dma_semaphore, #tpu.memory_space<semaphore_mem>>
    %88 = tpu.memref_squeeze %87 : memref<1x!tpu.dma_semaphore, #tpu.memory_space<semaphore_mem>> -> memref<!tpu.dma_semaphore, #tpu.memory_space<semaphore_mem>>
    tpu.wait_dma2 semaphore(%88 : memref<!tpu.dma_semaphore, #tpu.memory_space<semaphore_mem>>) src(%85 : memref<1x32xf32, #tpu.memory_space<any>>) dst(%86 : memref<1x32xf32, #tpu.memory_space<vmem>>)
    %c0 = arith.constant 0 : index
    %c0_64 = arith.constant 0 : index
    %89 = vector.load %arg8[%c0, %c0_64] : memref<8x32xf32, #tpu.memory_space<vmem>>, vector<8x32xf32>
    %c0_65 = arith.constant 0 : index
    %c0_66 = arith.constant 0 : index
    %90 = vector.load %arg3[%c0_65, %c0_66] : memref<16x32xf32, #tpu.memory_space<vmem>>, vector<16x32xf32>
    %cst = arith.constant dense<0.000000e+00> : vector<8x16xf32>
    %91 = tpu.matmul %89, %90, %cst {dimension_numbers = #tpu.dot_dimension_numbers<[1], [1], [0], [0], [0, 0, 1, 0], [], []>} : vector<8x32xf32>, vector<16x32xf32>, vector<8x16xf32> -> vector<8x16xf32>
    %c0_67 = arith.constant 0 : index
    %c0_68 = arith.constant 0 : index
    %92 = vector.load %arg4[%c0_67, %c0_68] : memref<1x16xf32, #tpu.memory_space<vmem>>, vector<1x16xf32>
    %93 = vector.broadcast %92 : vector<1x16xf32> to vector<8x16xf32>
    %94 = arith.addf %91, %93 : vector<8x16xf32>
    %c0_69 = arith.constant 0 : index
    %c0_70 = arith.constant 0 : index
    %95 = vector.load %arg5[%c0_69, %c0_70] : memref<8x16xf32, #tpu.memory_space<vmem>>, vector<8x16xf32>
    %96 = arith.mulf %94, %95 : vector<8x16xf32>
    %cst_71 = arith.constant dense<0.000000e+00> : vector<8xf32>
    %97 = vector.multi_reduction <add>, %96, %cst_71 [1] : vector<8x16xf32> to vector<8xf32>
    %98 = vector.shape_cast %97 : vector<8xf32> to vector<8x1xf32>
    %c0_72 = arith.constant 0 : index
    %c0_73 = arith.constant 0 : index
    %99 = vector.load %arg6[%c0_72, %c0_73] : memref<8x1xf32, #tpu.memory_space<vmem>>, vector<8x1xf32>
    %100 = arith.mulf %98, %99 : vector<8x1xf32>
    %101 = arith.negf %100 : vector<8x1xf32>
    %102 = math.exp %101 : vector<8x1xf32>
    %cst_74 = arith.constant 1.000000e+00 : f32
    %103 = vector.broadcast %cst_74 : f32 to vector<8x1xf32>
    %104 = arith.addf %103, %102 : vector<8x1xf32>
    %105 = arith.divf %103, %104 : vector<8x1xf32>
    %c0_75 = arith.constant 0 : index
    %c0_76 = arith.constant 0 : index
    %106 = vector.load %arg7[%c0_75, %c0_76] : memref<8x1xf32, #tpu.memory_space<vmem>>, vector<8x1xf32>
    tpu.vector_store %arg7[%c0_75, %c0_76], %105 {strides = array<i32>} : memref<8x1xf32, #tpu.memory_space<vmem>>, vector<8x1xf32>,
    return
  }
  func.func @transform_1(%arg0: i32, %arg1: memref<8xi32, #tpu.memory_space<smem>>) -> (i32, i32) {
    %c0_i32 = arith.constant 0 : i32
    %c0_i32_0 = arith.constant 0 : i32
    %c0_i32_1 = arith.constant 0 : i32
    return %c0_i32, %c0_i32_0 : i32, i32
  }
  func.func @transform_2(%arg0: i32, %arg1: memref<8xi32, #tpu.memory_space<smem>>) -> (i32, i32) {
    %c0_i32 = arith.constant 0 : i32
    %c0_i32_0 = arith.constant 0 : i32
    %c0_i32_1 = arith.constant 0 : i32
    return %c0_i32, %c0_i32_0 : i32, i32
  }
  func.func @transform_3(%arg0: i32, %arg1: memref<8xi32, #tpu.memory_space<smem>>) -> (i32, i32) {
    %c0_i32 = arith.constant 0 : i32
    %c0_i32_0 = arith.constant 0 : i32
    return %arg0, %c0_i32 : i32, i32
  }
  func.func @transform_4(%arg0: i32, %arg1: memref<8xi32, #tpu.memory_space<smem>>) -> (i32, i32) {
    %c0_i32 = arith.constant 0 : i32
    %c0_i32_0 = arith.constant 0 : i32
    return %arg0, %c0_i32 : i32, i32
  }
  func.func @transform_5(%arg0: i32, %arg1: memref<8xi32, #tpu.memory_space<smem>>) -> (i32, i32) {
    %c0_i32 = arith.constant 0 : i32
    %c0_i32_0 = arith.constant 0 : i32
    return %arg0, %c0_i32 : i32, i32
  }
}

</mosaic_0001>

<llo_original>
// kernel: _lambda_.1
$region0: #{_lambda_.1}
  #allocation0 [shape = 'u32[]', space=smem, size = 0x4, offset = 0x4, fixed_abs, tag = 'smem constant byte address 0x4 - core index']
  #allocation1 [shape = 'u32[144,128]{1,0:T(1,128)}', space=vmem, size = 0x12000, scoped, tag = 'internal scratch']
  #allocation2 [shape = 'f32[8,32]{1,0:T(8,128)}', space=vmem, size = 0x1000, scoped, tag = 'scratch operand']
  #allocation3 [shape = 's32[8]{0}', space=sflag, size = 0x20, scoped, tag = 'scratch operand']
  #allocation4 [shape = 's32[1]{0}', space=sflag, size = 0x4, scoped, tag = 'scoped memory for _lambda_.1']
  #allocation5 [shape = 'u8[512]{0}', space=smem, size = 0x200, scoped, tag = 'prefetched SMEM operand 0']
  #allocation8 [shape = 's32[]', space=sflag, size = 0x4, offset = 0, fixed_abs, tag = 'sflag constant byte address 0x0 - dummy sync flag']
  #allocation9 [shape = 's32[]', space=sflag, size = 0x4, offset = 0, fixed_abs, tag = 'sflag constant byte address 0x0 - dummy sync flag']
  #allocation10 [shape = 'u32[]', space=smem, size = 0x4, offset = 0x44, fixed_abs, tag = 'smem constant byte address 0x44 - assertion arg 0']
  #allocation11 [shape = 'u32[]', space=smem, size = 0x4, offset = 0x48, fixed_abs, tag = 'smem constant byte address 0x48 - assertion arg 1']
  #allocation12 [shape = 's32[]', space=sflag, size = 0x4, offset = 0, fixed_abs, tag = 'sflag constant byte address 0x0 - dummy sync flag']
  #allocation13 [shape = 's32[]', space=sflag, size = 0x4, offset = 0, fixed_abs, tag = 'sflag constant byte address 0x0 - dummy sync flag']
  #allocation14 [shape = 's32[]', space=sflag, size = 0x4, offset = 0, fixed_abs, tag = 'sflag constant byte address 0x0 - dummy sync flag']
  #allocation15 [shape = 's32[]', space=sflag, size = 0x4, offset = 0, fixed_abs, tag = 'sflag constant byte address 0x0 - dummy sync flag']
  #allocation16 [shape = 's32[]', space=sflag, size = 0x4, offset = 0, fixed_abs, tag = 'sflag constant byte address 0x0 - dummy sync flag']
  #allocation17 [shape = 's32[]', space=sflag, size = 0x4, offset = 0, fixed_abs, tag = 'sflag constant byte address 0x0 - dummy sync flag']
  #allocation18 [shape = 's32[]', space=sflag, size = 0x4, offset = 0, fixed_abs, tag = 'sflag constant byte address 0x0 - dummy sync flag']
  #allocation19 [shape = 's32[]', space=sflag, size = 0x4, offset = 0, fixed_abs, tag = 'sflag constant byte address 0x0 - dummy sync flag']
  #allocation20 [shape = 's32[]', space=sflag, size = 0x4, offset = 0, fixed_abs, tag = 'sflag constant byte address 0x0 - dummy sync flag']
  #allocation21 [shape = 's32[]', space=sflag, size = 0x4, offset = 0, fixed_abs, tag = 'sflag constant byte address 0x0 - dummy sync flag']
  #allocation22 [shape = 's32[]', space=sflag, size = 0x4, offset = 0, fixed_abs, tag = 'sflag constant byte address 0x0 - dummy sync flag']
  #allocation23 [shape = 's32[]', space=sflag, size = 0x4, offset = 0, fixed_abs, tag = 'sflag constant byte address 0x0 - dummy sync flag']
  #allocation24 [shape = 's32[]', space=sflag, size = 0x4, offset = 0, fixed_abs, tag = 'sflag constant byte address 0x0 - dummy sync flag']
  #allocation25 [shape = 's32[]', space=sflag, size = 0x4, offset = 0, fixed_abs, tag = 'sflag constant byte address 0x0 - dummy sync flag']
  %s0 = inlined_call_operand.hbm [shape: s32[8], index: 0, kind: input, shape index: {}]
  %s1 = inlined_call_operand.hbm [shape: f32[12,32], index: 1, kind: input, shape index: {}]
  %s2 = inlined_call_operand.vmem [shape: f32[16,32], index: 2, kind: input, shape index: {}]
  %s3 = inlined_call_operand.vmem [shape: f32[1,16], index: 3, kind: input, shape index: {}]
  %s4 = inlined_call_operand.hbm [shape: f32[8,16], index: 4, kind: input, shape index: {}]
  %s5 = inlined_call_operand.vmem [shape: f32[8,1], index: 5, kind: input, shape index: {}]
  %s6 = inlined_call_operand.vmem [shape: f32[8,1], index: 6, kind: output, shape index: {}]
  %s7 = sld [smem:[#allocation0]]
  $region62: #{_lambda_.1} parent=0
    _
  %s9 = ssub.s32 1, %s7
  %s10 = scalar_select 0, %s9, %s7
  %12 = dma.hbm_to_smem %s0, 16, [#allocation5], [#allocation4]
  %13 = dma.done [#allocation4], 16
  %14 = sfence
  $region1: #{_lambda_.1} parent=0
    #allocation6 [shape = 'u8[4096]{0}', space=vmem, size = 0x1000, scoped, tag = 'input window, operand 4, single buffered']
    #allocation7 [shape = 's32[1]{0}', space=sflag, size = 0x4, scoped, tag = 'scoped memory for _lambda_.1']
    %15 = vsyncpa [#allocation7], 0
    // Predicated region
    $region2: #{_lambda_.1} parent=1 // pred_check
      _
    $region3: #{_lambda_.1} parent=1 // pred_check_branch
      %17 = sbr.rel (0) target = $region5
    $region4: #{_lambda_.1} parent=1 // pred_region
      _
    $region5: #{_lambda_.1} parent=1 // pred_fallthru
      _
    // Predicated region
    $region6: #{_lambda_.1} parent=1 // pred_check
      _
    $region7: #{_lambda_.1} parent=1 // pred_check_branch
      %19 = sbr.rel (0) target = $region9
    $region8: #{_lambda_.1} parent=1 // pred_region
      _
    $region9: #{_lambda_.1} parent=1 // pred_fallthru
      _
    // Predicated region
    $region10: #{_lambda_.1} parent=1 // pred_check
      _
    $region11: #{_lambda_.1} parent=1 // pred_check_branch
      %21 = sbr.rel (0) target = $region13
    $region12: #{_lambda_.1} parent=1 // pred_region
      %s23 = ssub.s32 128, 128
      %24 = vsyncadd [#allocation7], %s23
      %s26 = sshll.u32 [#allocation6], 4
      %s27 = int_to_ptr.vmem [resolvable:$true] %s26
      %29 = dma.hbm_to_vmem [thread:$0]  %s4, 128, %s27, [#allocation7]
    $region13: #{_lambda_.1} parent=1 // pred_fallthru
      _
    // Predicated region
    $region14: #{_lambda_.1} parent=1 // pred_check
      _
    $region15: #{_lambda_.1} parent=1 // pred_check_branch
      %31 = sbr.rel (0) target = $region17
    $region16: #{_lambda_.1} parent=1 // pred_region
      _
    $region17: #{_lambda_.1} parent=1 // pred_fallthru
      _
    // Predicated region
    $region18: #{_lambda_.1} parent=1 // pred_check
      _
    $region19: #{_lambda_.1} parent=1 // pred_check_branch
      %33 = sbr.rel (0) target = $region21
    $region20: #{_lambda_.1} parent=1 // pred_region
      %34 = dma.done [#allocation7], 128
    $region21: #{_lambda_.1} parent=1 // pred_fallthru
      _
    %s35 = smul.u32 0, 8
    %s36 = sld [smem:[#allocation5 + %s35]]
    %s37 = smul.addr %s36, 16
    %s38 = scalar_lea.hbm %s1, %s37
    // Predicated region
    $region22: #{_lambda_.1} parent=1 // pred_check
      _
    $region23: #{_lambda_.1} parent=1 // pred_check_branch
      %40 = sbr.rel target = $region25
    $region24: #{_lambda_.1} parent=1 // pred_region
      %41 = sst [smem:[#allocation10]] [#allocation9]
      %42 = sst [smem:[#allocation11]] [#allocation8]
    $region25: #{_lambda_.1} parent=1 // pred_fallthru
      _
    %44 = shalt.err (0)
    %s46 = sshll.u32 [#allocation2], 4
    %s47 = int_to_ptr.vmem [resolvable:$true] %s46
    %49 = dma.hbm_to_vmem [thread:$0]  %s38, 16, %s47, [#allocation3]
    %s50 = sadd.s32 %s35, 1
    %s51 = sld [smem:[#allocation5 + %s50]]
    %s52 = smul.addr %s51, 16
    %s53 = scalar_lea.hbm %s1, %s52
    %s54 = scalar_lea.vmem [#allocation2], 1
    %s55 = scalar_lea.sflag [#allocation3], 1
    // Predicated region
    $region26: #{_lambda_.1} parent=1 // pred_check
      _
    $region27: #{_lambda_.1} parent=1 // pred_check_branch
      %57 = sbr.rel target = $region29
    $region28: #{_lambda_.1} parent=1 // pred_region
      %58 = sst [smem:[#allocation10]] [#allocation13]
      %59 = sst [smem:[#allocation11]] [#allocation12]
    $region29: #{_lambda_.1} parent=1 // pred_fallthru
      _
    %61 = shalt.err (0)
    %s63 = sshll.u32 %s54, 4
    %s64 = int_to_ptr.vmem [resolvable:$true] %s63
    %66 = dma.hbm_to_vmem [thread:$0]  %s53, 16, %s64, %s55
    %s67 = sadd.s32 %s35, 2
    %s68 = sld [smem:[#allocation5 + %s67]]
    %s69 = smul.addr %s68, 16
    %s70 = scalar_lea.hbm %s1, %s69
    %s71 = scalar_lea.vmem [#allocation2], 2
    %s72 = scalar_lea.sflag [#allocation3], 2
    // Predicated region
    $region30: #{_lambda_.1} parent=1 // pred_check
      _
    $region31: #{_lambda_.1} parent=1 // pred_check_branch
      %74 = sbr.rel target = $region33
    $region32: #{_lambda_.1} parent=1 // pred_region
      %75 = sst [smem:[#allocation10]] [#allocation15]
      %76 = sst [smem:[#allocation11]] [#allocation14]
    $region33: #{_lambda_.1} parent=1 // pred_fallthru
      _
    %78 = shalt.err (0)
    %s80 = sshll.u32 %s71, 4
    %s81 = int_to_ptr.vmem [resolvable:$true] %s80
    %83 = dma.hbm_to_vmem [thread:$0]  %s70, 16, %s81, %s72
    %s84 = sadd.s32 %s35, 3
    %s85 = sld [smem:[#allocation5 + %s84]]
    %s86 = smul.addr %s85, 16
    %s87 = scalar_lea.hbm %s1, %s86
    %s88 = scalar_lea.vmem [#allocation2], 3
    %s89 = scalar_lea.sflag [#allocation3], 3
    // Predicated region
    $region34: #{_lambda_.1} parent=1 // pred_check
      _
    $region35: #{_lambda_.1} parent=1 // pred_check_branch
      %91 = sbr.rel target = $region37
    $region36: #{_lambda_.1} parent=1 // pred_region
      %92 = sst [smem:[#allocation10]] [#allocation17]
      %93 = sst [smem:[#allocation11]] [#allocation16]
    $region37: #{_lambda_.1} parent=1 // pred_fallthru
      _
    %95 = shalt.err (0)
    %s97 = sshll.u32 %s88, 4
    %s98 = int_to_ptr.vmem [resolvable:$true] %s97
    %100 = dma.hbm_to_vmem [thread:$0]  %s87, 16, %s98, %s89
    %s101 = sadd.s32 %s35, 4
    %s102 = sld [smem:[#allocation5 + %s101]]
    %s103 = smul.addr %s102, 16
    %s104 = scalar_lea.hbm %s1, %s103
    %s105 = scalar_lea.vmem [#allocation2], 4
    %s106 = scalar_lea.sflag [#allocation3], 4
    // Predicated region
    $region38: #{_lambda_.1} parent=1 // pred_check
      _
    $region39: #{_lambda_.1} parent=1 // pred_check_branch
      %108 = sbr.rel target = $region41
    $region40: #{_lambda_.1} parent=1 // pred_region
      %109 = sst [smem:[#allocation10]] [#allocation19]
      %110 = sst [smem:[#allocation11]] [#allocation18]
    $region41: #{_lambda_.1} parent=1 // pred_fallthru
      _
    %112 = shalt.err (0)
    %s114 = sshll.u32 %s105, 4
    %s115 = int_to_ptr.vmem [resolvable:$true] %s114
    %117 = dma.hbm_to_vmem [thread:$0]  %s104, 16, %s115, %s106
    %s118 = sadd.s32 %s35, 5
    %s119 = sld [smem:[#allocation5 + %s118]]
    %s120 = smul.addr %s119, 16
    %s121 = scalar_lea.hbm %s1, %s120
    %s122 = scalar_lea.vmem [#allocation2], 5
    %s123 = scalar_lea.sflag [#allocation3], 5
    // Predicated region
    $region42: #{_lambda_.1} parent=1 // pred_check
      _
    $region43: #{_lambda_.1} parent=1 // pred_check_branch
      %125 = sbr.rel target = $region45
    $region44: #{_lambda_.1} parent=1 // pred_region
      %126 = sst [smem:[#allocation10]] [#allocation21]
      %127 = sst [smem:[#allocation11]] [#allocation20]
    $region45: #{_lambda_.1} parent=1 // pred_fallthru
      _
    %129 = shalt.err (0)
    %s131 = sshll.u32 %s122, 4
    %s132 = int_to_ptr.vmem [resolvable:$true] %s131
    %134 = dma.hbm_to_vmem [thread:$0]  %s121, 16, %s132, %s123
    %s135 = sadd.s32 %s35, 6
    %s136 = sld [smem:[#allocation5 + %s135]]
    %s137 = smul.addr %s136, 16
    %s138 = scalar_lea.hbm %s1, %s137
    %s139 = scalar_lea.vmem [#allocation2], 6
    %s140 = scalar_lea.sflag [#allocation3], 6
    // Predicated region
    $region46: #{_lambda_.1} parent=1 // pred_check
      _
    $region47: #{_lambda_.1} parent=1 // pred_check_branch
      %142 = sbr.rel target = $region49
    $region48: #{_lambda_.1} parent=1 // pred_region
      %143 = sst [smem:[#allocation10]] [#allocation23]
      %144 = sst [smem:[#allocation11]] [#allocation22]
    $region49: #{_lambda_.1} parent=1 // pred_fallthru
      _
    %146 = shalt.err (0)
    %s148 = sshll.u32 %s139, 4
    %s149 = int_to_ptr.vmem [resolvable:$true] %s148
    %151 = dma.hbm_to_vmem [thread:$0]  %s138, 16, %s149, %s140
    %s152 = sadd.s32 %s35, 7
    %s153 = sld [smem:[#allocation5 + %s152]]
    %s154 = smul.addr %s153, 16
    %s155 = scalar_lea.hbm %s1, %s154
    %s156 = scalar_lea.vmem [#allocation2], 7
    %s157 = scalar_lea.sflag [#allocation3], 7
    // Predicated region
    $region50: #{_lambda_.1} parent=1 // pred_check
      _
    $region51: #{_lambda_.1} parent=1 // pred_check_branch
      %159 = sbr.rel target = $region53
    $region52: #{_lambda_.1} parent=1 // pred_region
      %160 = sst [smem:[#allocation10]] [#allocation25]
      %161 = sst [smem:[#allocation11]] [#allocation24]
    $region53: #{_lambda_.1} parent=1 // pred_fallthru
      _
    %163 = shalt.err (0)
    %s165 = sshll.u32 %s156, 4
    %s166 = int_to_ptr.vmem [resolvable:$true] %s165
    %168 = dma.hbm_to_vmem [thread:$0]  %s155, 16, %s166, %s157
    %s169 = smul.u32 1, 1
    %s170 = sshll.u32 %s169, 4
    %171 = dma.done [#allocation3], %s170
    %s172 = sshll.u32 %s169, 4
    %173 = dma.done %s55, %s172
    %s174 = sshll.u32 %s169, 4
    %175 = dma.done %s72, %s174
    %s176 = sshll.u32 %s169, 4
    %177 = dma.done %s89, %s176
    %s178 = sshll.u32 %s169, 4
    %179 = dma.done %s106, %s178
    %s180 = sshll.u32 %s169, 4
    %181 = dma.done %s123, %s180
    %s182 = sshll.u32 %s169, 4
    %183 = dma.done %s140, %s182
    %s184 = sshll.u32 %s169, 4
    %185 = dma.done %s157, %s184
    %v186 = vld [vmem:[#allocation2] sm:$0xff]
    %v187 = vld [vmem:[%s2] sm:$0xff]
    %v188 = vld [vmem:[%s2 + $0x8] sm:$0xff]
    %v189 = vld [vmem:[%s3] sm:$0x1]
    %v191 = vlaneseq
    %v192 = vshrl.u32 %v191, 7
    %v193 = vsub.s32 0, %v192
    %v194 = vrot.slane %v189, %v193
    %vm196 = vcmask 261120
    %v198 = vsel %vm196, %v186, 0
    %v201 = vsel %vm196, %v187, 0
    %v204 = vsel %vm196, %v188, 0
    %206 = vmatprep.subr.mxu0 0.0
    %207 = vmatpush1.xpose.msra.mxu0 0.0
    %208 = vmatprep.subr.mxu0 0.0
    %209 = vmatpush1.xpose.msra.mxu0 0.0
    %210 = vmatprep.subr.mxu0 0.0
    %211 = vmatpush1.xpose.msra.mxu0 0.0
    %212 = vmatprep.subr.mxu0 0.0
    %213 = vmatpush1.xpose.msra.mxu0 0.0
    %214 = vmatprep.subr.mxu0 0.0
    %215 = vmatpush1.xpose.msra.mxu0 0.0
    %216 = vmatprep.subr.mxu0 0.0
    %217 = vmatpush1.xpose.msra.mxu0 0.0
    %218 = vmatprep.subr.mxu0 0.0
    %219 = vmatpush1.xpose.msra.mxu0 0.0
    %220 = vmatprep.subr.mxu0 0.0
    %221 = vmatpush1.xpose.msra.mxu0 0.0
    %222 = vmatprep.subr.mxu0 0.0
    %223 = vmatpush1.xpose.msra.mxu0 0.0
    %224 = vmatprep.subr.mxu0 0.0
    %225 = vmatpush1.xpose.msra.mxu0 0.0
    %226 = vmatprep.subr.mxu0 0.0
    %227 = vmatpush1.xpose.msra.mxu0 0.0
    %228 = vmatprep.subr.mxu0 0.0
    %229 = vmatpush1.xpose.msra.mxu0 0.0
    %230 = vmatprep.subr.mxu0 0.0
    %231 = vmatpush1.xpose.msra.mxu0 0.0
    %232 = vmatprep.subr.mxu0 0.0
    %233 = vmatpush1.xpose.msra.mxu0 0.0
    %234 = vmatprep.subr.mxu0 0.0
    %235 = vmatpush1.xpose.msra.mxu0 %v204
    %236 = vmatprep.subr.mxu0 0.0
    %237 = vmatpush1.xpose.msra.mxu0 %v201
    %238 = vmatprep.subr.mxu0 0.0
    %239 = vmatpush2.xpose.msra.mxu0 0.0
    %240 = vmatprep.subr.mxu0 0.0
    %241 = vmatpush2.xpose.msra.mxu0 0.0
    %242 = vmatprep.subr.mxu0 0.0
    %243 = vmatpush2.xpose.msra.mxu0 0.0
    %244 = vmatprep.subr.mxu0 0.0
    %245 = vmatpush2.xpose.msra.mxu0 0.0
    %246 = vmatprep.subr.mxu0 0.0
    %247 = vmatpush2.xpose.msra.mxu0 0.0
    %248 = vmatprep.subr.mxu0 0.0
    %249 = vmatpush2.xpose.msra.mxu0 0.0
    %250 = vmatprep.subr.mxu0 0.0
    %251 = vmatpush2.xpose.msra.mxu0 0.0
    %252 = vmatprep.subr.mxu0 0.0
    %253 = vmatpush2.xpose.msra.mxu0 0.0
    %254 = vmatprep.subr.mxu0 0.0
    %255 = vmatpush2.xpose.msra.mxu0 0.0
    %256 = vmatprep.subr.mxu0 0.0
    %257 = vmatpush2.xpose.msra.mxu0 0.0
    %258 = vmatprep.subr.mxu0 0.0
    %259 = vmatpush2.xpose.msra.mxu0 0.0
    %260 = vmatprep.subr.mxu0 0.0
    %261 = vmatpush2.xpose.msra.mxu0 0.0
    %262 = vmatprep.subr.mxu0 0.0
    %263 = vmatpush2.xpose.msra.mxu0 0.0
    %264 = vmatprep.subr.mxu0 0.0
    %265 = vmatpush2.xpose.msra.mxu0 0.0
    %266 = vmatprep.subr.mxu0 0.0
    %267 = vmatpush2.xpose.msra.mxu0 0.0
    %268 = vmatprep.subr.mxu0 0.0
    %269 = vmatpush2.xpose.msra.mxu0 0.0
    %270 = vmatprep.mubr.f32.mxu0 0.0
    %271 = vmatmul.mubr.f32.gmra.mxu0 %v198
    %v272 = vpop.f32.mrf.mxu0
    %v273 = vadd.f32 %v194, %v272
    %v274 = vpop.f32.mrf.mxu0
    %275 = vdwg.mxu0
    %v276 = vld [vmem:[#allocation6] sm:$0xff]
    %v277 = vmul.f32 %v273, %v276
    %vm278 = vcmask 130048
    %v279 = vsel %vm278, %v277, 0.0
    %280 = vadd.xlane.f32.xlu0 %v279
    %v281 = vpop.xlane.xlu0 %280
    %v282 = vld [vmem:[%s5] sm:$0xff]
    %v283 = vmul.f32 %v281, %v282
    %v284 = vxor.u32 %v283, 2147483648
    %v285 = vmul.f32 %v284, 1.442695
    %v286 = vpow.pop %v285
    %v287 = vadd.f32 %v286, 1.0
    %v288 = vrcp.pop %v287
    %v289 = vmul.f32 1.0, %v288
    %vm290 = vcmask 7168
    %291 = vst.msk [vmem:[%s6] sm:$0xff] %vm290, %v289
    // Predicated region
    $region54: #{_lambda_.1} parent=1 // pred_check
      _
    $region55: #{_lambda_.1} parent=1 // pred_check_branch
      %293 = sbr.rel (0) target = $region57
    $region56: #{_lambda_.1} parent=1 // pred_region
      _
    $region57: #{_lambda_.1} parent=1 // pred_fallthru
      _
    // Predicated region
    $region58: #{_lambda_.1} parent=1 // pred_check
      _
    $region59: #{_lambda_.1} parent=1 // pred_check_branch
      %295 = sbr.rel (0) target = $region61
    $region60: #{_lambda_.1} parent=1 // pred_region
      _
    $region61: #{_lambda_.1} parent=1 // pred_fallthru
      _
    %296 = vsyncpa [#allocation7], 1
  %297 = vsyncmov [#allocation3]
  %s298 = vpop.sfrf %297
  %p299 = scmp.eq.s32.totalorder %s298, 0
  %p300 = pneg %p299
  %302 = shalt.err (%p300)
  %s303 = scalar_lea.sflag [#allocation3], 1
  %304 = vsyncmov %s303
  %s305 = vpop.sfrf %304
  %p306 = scmp.eq.s32.totalorder %s305, 0
  %p307 = pneg %p306
  %309 = shalt.err (%p307)
  %s310 = scalar_lea.sflag [#allocation3], 2
  %311 = vsyncmov %s310
  %s312 = vpop.sfrf %311
  %p313 = scmp.eq.s32.totalorder %s312, 0
  %p314 = pneg %p313
  %316 = shalt.err (%p314)
  %s317 = scalar_lea.sflag [#allocation3], 3
  %318 = vsyncmov %s317
  %s319 = vpop.sfrf %318
  %p320 = scmp.eq.s32.totalorder %s319, 0
  %p321 = pneg %p320
  %323 = shalt.err (%p321)
  %s324 = scalar_lea.sflag [#allocation3], 4
  %325 = vsyncmov %s324
  %s326 = vpop.sfrf %325
  %p327 = scmp.eq.s32.totalorder %s326, 0
  %p328 = pneg %p327
  %330 = shalt.err (%p328)
  %s331 = scalar_lea.sflag [#allocation3], 5
  %332 = vsyncmov %s331
  %s333 = vpop.sfrf %332
  %p334 = scmp.eq.s32.totalorder %s333, 0
  %p335 = pneg %p334
  %337 = shalt.err (%p335)
  %s338 = scalar_lea.sflag [#allocation3], 6
  %339 = vsyncmov %s338
  %s340 = vpop.sfrf %339
  %p341 = scmp.eq.s32.totalorder %s340, 0
  %p342 = pneg %p341
  %344 = shalt.err (%p342)
  %s345 = scalar_lea.sflag [#allocation3], 7
  %346 = vsyncmov %s345
  %s347 = vpop.sfrf %346
  %p348 = scmp.eq.s32.totalorder %s347, 0
  %p349 = pneg %p348
  %351 = shalt.err (%p349)

</llo_original>
